<compile_context>
chip_gen: v7x
topology: tpu7x:2x2x1
jax: 0.10.0
libtpu: 0.0.40
codegen_flags: <defaults>
</compile_context>

<pallas_src>
import jax
import jax.numpy as jnp
from jax.experimental import pallas as pl
from jax.experimental.pallas import tpu as pltpu

IN_DIM = 64
H1 = 500
H2 = 128
OUT_DIM = 2
H1_PAD = 512          # 500 -> 512: multiple of 128 lanes
OUT_PAD = 8           # 2 -> 8: minimal sublane/lane-legal slab (full last dim)
NEG_SLOPE = 0.01      # PyTorch LeakyReLU default


def _leaky_relu(x):
    return jnp.where(x > 0, x, NEG_SLOPE * x)


def _round_up(n, m):
    return ((n + m - 1) // m) * m


def mlp_kernel(x_ref, w1_ref, b1_ref, w2_ref, b2_ref, w3_ref, b3_ref, o_ref):
    # x tile (TB, 64): run all three matmuls on the native bf16 MXU path with
    # f32 accumulation via preferred_element_type.
    x = x_ref[...]
    if x.dtype != jnp.bfloat16:
        x = x.astype(jnp.bfloat16)
    h1 = jnp.dot(x, w1_ref[...], preferred_element_type=jnp.float32)
    h1 = _leaky_relu(h1 + b1_ref[...])                                # (TB, 512) f32
    h2 = jnp.dot(h1.astype(jnp.bfloat16), w2_ref[...],
                 preferred_element_type=jnp.float32)
    h2 = _leaky_relu(h2 + b2_ref[...])                                # (TB, 128) f32
    o = jnp.dot(h2.astype(jnp.bfloat16), w3_ref[...],
                preferred_element_type=jnp.float32)
    o_ref[...] = (o + b3_ref[...]).astype(o_ref.dtype)                # (TB, 8)


def linear_net_mul_forward(x, kernel_params, *, tb=2048):
    """Forward pass of LinearNet_mul as a fused, batch-tiled Pallas TPU kernel.

    `kernel_params` must come from `prepare_kernel_params` (padded, bf16
    weights / f32 biases). Returns a (B, OUT_DIM) f32 array. `x` may be f32
    or bf16.
    """
    w1, b1, w2, b2, w3, b3 = kernel_params
    B = x.shape[0]

    # Pad the batch only to a multiple of 8 sublanes (no full-TB pad pass).
    B8 = _round_up(B, 8)
    if B8 != B:
        x = jnp.pad(x, ((0, B8 - B), (0, 0)))

    # Batch tile: big enough to amortize the ~0.35us per-step overhead, but
    # split into >=2 grid steps whenever possible so both v7x TensorCores get
    # work ("parallel" batch axis). Ragged last tile is masked by Pallas.
    TB = min(tb, max(8, _round_up((B8 + 1) // 2, 8)))
    grid = (pl.cdiv(B8, TB),)

    # Advisory cost estimate so XLA can schedule around this custom call.
    flops = 2 * B8 * (IN_DIM * H1_PAD + H1_PAD * H2 + H2 * OUT_PAD)
    bytes_accessed = (
        B8 * IN_DIM * x.dtype.itemsize
        + sum(int(p.size) * p.dtype.itemsize for p in kernel_params)
        + B8 * OUT_PAD * 4
    )

    # VMEM: ~4.5 KiB/row live (f32/bf16 intermediates + double-buffered x/out
    # tiles) + ~0.4 MiB resident weights -> ~<10 MiB at TB=2048, under every
    # generation's default scoped limit (16/32/32 MiB on v5e/v6e/v7x). Only
    # bump the limit when a caller pushes TB beyond 2048.
    vmem_limit = None
    if TB > 2048:
        vmem_limit = min(max(TB * 5 * 1024 + (4 << 20), 32 << 20), 64 << 20)

    out = pl.pallas_call(
        mlp_kernel,
        out_shape=jax.ShapeDtypeStruct((B8, OUT_PAD), jnp.float32),
        grid_spec=pltpu.PrefetchScalarGridSpec(
            num_scalar_prefetch=0,
            grid=grid,
            in_specs=[
                pl.BlockSpec((TB, IN_DIM), lambda i: (i, 0)),       # x: pipelined
                pl.BlockSpec((IN_DIM, H1_PAD), lambda i: (0, 0)),   # w1: resident
                pl.BlockSpec((1, H1_PAD), lambda i: (0, 0)),        # b1: resident
                pl.BlockSpec((H1_PAD, H2), lambda i: (0, 0)),       # w2: resident
                pl.BlockSpec((1, H2), lambda i: (0, 0)),            # b2: resident
                pl.BlockSpec((H2, OUT_PAD), lambda i: (0, 0)),      # w3: resident
                pl.BlockSpec((1, OUT_PAD), lambda i: (0, 0)),       # b3: resident
            ],
            out_specs=pl.BlockSpec((TB, OUT_PAD), lambda i: (i, 0)),
        ),
        compiler_params=pltpu.CompilerParams(
            dimension_semantics=("parallel",),   # shard batch tiles across TCs (v7x)
            vmem_limit_bytes=vmem_limit,
        ),
        cost_estimate=pl.CostEstimate(
            flops=flops, transcendentals=0, bytes_accessed=bytes_accessed),
    )(x, w1, b1, w2, b2, w3, b3)
    return out[:B, :OUT_DIM]


def init_params(key):
    """PyTorch nn.Linear default init (uniform +/-1/sqrt(fan_in)), f32, unpadded."""
    ks = jax.random.split(key, 6)

    def lin(kw, kb, fan_in, fan_out):
        bound = 1.0 / jnp.sqrt(float(fan_in))
        w = jax.random.uniform(kw, (fan_in, fan_out), jnp.float32, -bound, bound)
        b = jax.random.uniform(kb, (1, fan_out), jnp.float32, -bound, bound)
        return w, b

    w1, b1 = lin(ks[0], ks[1], IN_DIM, H1)
    w2, b2 = lin(ks[2], ks[3], H1, H2)
    w3, b3 = lin(ks[4], ks[5], H2, OUT_DIM)
    return (w1, b1, w2, b2, w3, b3)


def prepare_kernel_params(params):
    """Zero-pad H1 500->512 and OUT 2->8; weights -> bf16, biases stay f32."""
    w1, b1, w2, b2, w3, b3 = params
    w1p = jnp.pad(w1, ((0, 0), (0, H1_PAD - H1))).astype(jnp.bfloat16)
    b1p = jnp.pad(b1, ((0, 0), (0, H1_PAD - H1)))
    w2p = jnp.pad(w2, ((0, H1_PAD - H1), (0, 0))).astype(jnp.bfloat16)
    b2p = b2
    w3p = jnp.pad(w3, ((0, 0), (0, OUT_PAD - OUT_DIM))).astype(jnp.bfloat16)
    b3p = jnp.pad(b3, ((0, 0), (0, OUT_PAD - OUT_DIM)))
    return (w1p, b1p, w2p, b2p, w3p, b3p)


def reference_forward_f32(x, params):
    """Pure-f32 reference of the original PyTorch module semantics."""
    w1, b1, w2, b2, w3, b3 = params
    h1 = jax.nn.leaky_relu(x @ w1 + b1, NEG_SLOPE)
    h2 = jax.nn.leaky_relu(h1 @ w2 + b2, NEG_SLOPE)
    return h2 @ w3 + b3


def reference_forward_bf16(x, kernel_params):
    """Pure-JAX reference mimicking the kernel's bf16-input / f32-accumulate numerics."""
    w1, b1, w2, b2, w3, b3 = kernel_params
    h1 = jax.nn.leaky_relu(
        jnp.dot(x.astype(jnp.bfloat16), w1, preferred_element_type=jnp.float32) + b1,
        NEG_SLOPE)
    h2 = jax.nn.leaky_relu(
        jnp.dot(h1.astype(jnp.bfloat16), w2, preferred_element_type=jnp.float32) + b2,
        NEG_SLOPE)
    o = jnp.dot(h2.astype(jnp.bfloat16), w3, preferred_element_type=jnp.float32) + b3
    return o[:, :OUT_DIM]


if __name__ == "__main__":
    # TODO(synk): the PyTorch module's np.isnan(np.sum(x)) guard (raise on NaN
    # input) is host-side control flow with no in-kernel equivalent; it does
    # not affect the returned value and is omitted.
    key = jax.random.PRNGKey(0)
    kx, kp = jax.random.split(key)
    params_f32 = init_params(kp)
    params_kernel = prepare_kernel_params(params_f32)

    # Case 1: small aligned batch (single grid step).
    B = 8
    x = jax.random.normal(kx, (B, IN_DIM), jnp.float32)
    out = jax.block_until_ready(linear_net_mul_forward(x, params_kernel))
    assert out.shape == (B, OUT_DIM)
    ref_bf16 = reference_forward_bf16(x, params_kernel)
    assert jnp.allclose(out, ref_bf16, atol=1e-4, rtol=1e-4)
    ref_f32 = reference_forward_f32(x, params_f32)
    assert jnp.allclose(out, ref_f32, atol=5e-2, rtol=5e-2)

    # Case 2: non-multiple-of-8 batch -> exercises the sublane pad, the >=2
    # grid steps split, and the masked ragged last tile.
    B2 = 20
    x2 = jax.random.normal(jax.random.PRNGKey(1), (B2, IN_DIM), jnp.float32)
    out2 = jax.block_until_ready(linear_net_mul_forward(x2, params_kernel))
    assert out2.shape == (B2, OUT_DIM)
    ref2_bf16 = reference_forward_bf16(x2, params_kernel)
    assert jnp.allclose(out2, ref2_bf16, atol=1e-4, rtol=1e-4)
    ref2_f32 = reference_forward_f32(x2, params_f32)
    assert jnp.allclose(out2, ref2_f32, atol=5e-2, rtol=5e-2)

    print("KERNEL_OK")
</pallas_src>

<mosaic_0001>
module attributes {stable_mosaic.version = 11 : i64} {
  func.func @mlp_kernel(%arg0: i32, %arg1: memref<8x64xf32, #tpu.memory_space<vmem>>, %arg2: memref<64x512xbf16, #tpu.memory_space<vmem>>, %arg3: memref<1x512xf32, #tpu.memory_space<vmem>>, %arg4: memref<512x128xbf16, #tpu.memory_space<vmem>>, %arg5: memref<1x128xf32, #tpu.memory_space<vmem>>, %arg6: memref<128x8xbf16, #tpu.memory_space<vmem>>, %arg7: memref<1x8xf32, #tpu.memory_space<vmem>>, %arg8: memref<8x8xf32, #tpu.memory_space<vmem>>) attributes {dimension_semantics = [#tpu.dimension_semantics<parallel>], iteration_bounds = array<i64: 1>, scalar_prefetch = 0 : i64, scratch_operands = 0 : i64, tpu.core_type = #tpu.core_type<tc>, window_params = [{transform_indices = @transform_0, window_bounds = array<i64: 8, 64>}, {pipeline_mode = #tpu.pipeline_mode<synchronous>, transform_indices = @transform_1, window_bounds = array<i64: 64, 512>}, {pipeline_mode = #tpu.pipeline_mode<synchronous>, transform_indices = @transform_2, window_bounds = array<i64: 1, 512>}, {pipeline_mode = #tpu.pipeline_mode<synchronous>, transform_indices = @transform_3, window_bounds = array<i64: 512, 128>}, {pipeline_mode = #tpu.pipeline_mode<synchronous>, transform_indices = @transform_4, window_bounds = array<i64: 1, 128>}, {pipeline_mode = #tpu.pipeline_mode<synchronous>, transform_indices = @transform_5, window_bounds = array<i64: 128, 8>}, {pipeline_mode = #tpu.pipeline_mode<synchronous>, transform_indices = @transform_6, window_bounds = array<i64: 1, 8>}, {transform_indices = @transform_7, window_bounds = array<i64: 8, 8>}]} {
    %c0 = arith.constant 0 : index
    %c0_0 = arith.constant 0 : index
    %0 = vector.load %arg1[%c0, %c0_0] : memref<8x64xf32, #tpu.memory_space<vmem>>, vector<8x64xf32>
    %1 = arith.truncf %0 : vector<8x64xf32> to vector<8x64xbf16>
    %c0_1 = arith.constant 0 : index
    %c0_2 = arith.constant 0 : index
    %2 = vector.load %arg2[%c0_1, %c0_2] : memref<64x512xbf16, #tpu.memory_space<vmem>>, vector<64x512xbf16>
    %cst = arith.constant dense<0.000000e+00> : vector<8x512xf32>
    %3 = tpu.matmul %1, %2, %cst {dimension_numbers = #tpu.dot_dimension_numbers<[1], [0], [0], [1], [0, 0, 1, 1], [], []>} : vector<8x64xbf16>, vector<64x512xbf16>, vector<8x512xf32> -> vector<8x512xf32>
    %c0_3 = arith.constant 0 : index
    %c0_4 = arith.constant 0 : index
    %4 = vector.load %arg3[%c0_3, %c0_4] : memref<1x512xf32, #tpu.memory_space<vmem>>, vector<1x512xf32>
    %5 = vector.broadcast %4 : vector<1x512xf32> to vector<8x512xf32>
    %6 = arith.addf %3, %5 : vector<8x512xf32>
    %cst_5 = arith.constant 0.000000e+00 : f32
    %7 = vector.broadcast %cst_5 : f32 to vector<8x512xf32>
    %8 = arith.cmpf ogt, %6, %7 : vector<8x512xf32>
    %cst_6 = arith.constant 0.00999999977 : f32
    %9 = vector.broadcast %cst_6 : f32 to vector<8x512xf32>
    %10 = arith.mulf %9, %6 : vector<8x512xf32>
    %11 = arith.select %8, %6, %10 : vector<8x512xi1>, vector<8x512xf32>
    %12 = arith.truncf %11 : vector<8x512xf32> to vector<8x512xbf16>
    %c0_7 = arith.constant 0 : index
    %c0_8 = arith.constant 0 : index
    %13 = vector.load %arg4[%c0_7, %c0_8] : memref<512x128xbf16, #tpu.memory_space<vmem>>, vector<512x128xbf16>
    %cst_9 = arith.constant dense<0.000000e+00> : vector<8x128xf32>
    %14 = tpu.matmul %12, %13, %cst_9 {dimension_numbers = #tpu.dot_dimension_numbers<[1], [0], [0], [1], [0, 0, 1, 1], [], []>} : vector<8x512xbf16>, vector<512x128xbf16>, vector<8x128xf32> -> vector<8x128xf32>
    %c0_10 = arith.constant 0 : index
    %c0_11 = arith.constant 0 : index
    %15 = vector.load %arg5[%c0_10, %c0_11] : memref<1x128xf32, #tpu.memory_space<vmem>>, vector<1x128xf32>
    %16 = vector.broadcast %15 : vector<1x128xf32> to vector<8x128xf32>
    %17 = arith.addf %14, %16 : vector<8x128xf32>
    %cst_12 = arith.constant 0.000000e+00 : f32
    %18 = vector.broadcast %cst_12 : f32 to vector<8x128xf32>
    %19 = arith.cmpf ogt, %17, %18 : vector<8x128xf32>
    %cst_13 = arith.constant 0.00999999977 : f32
    %20 = vector.broadcast %cst_13 : f32 to vector<8x128xf32>
    %21 = arith.mulf %20, %17 : vector<8x128xf32>
    %22 = arith.select %19, %17, %21 : vector<8x128xi1>, vector<8x128xf32>
    %23 = arith.truncf %22 : vector<8x128xf32> to vector<8x128xbf16>
    %c0_14 = arith.constant 0 : index
    %c0_15 = arith.constant 0 : index
    %24 = vector.load %arg6[%c0_14, %c0_15] : memref<128x8xbf16, #tpu.memory_space<vmem>>, vector<128x8xbf16>
    %cst_16 = arith.constant dense<0.000000e+00> : vector<8x8xf32>
    %25 = tpu.matmul %23, %24, %cst_16 {dimension_numbers = #tpu.dot_dimension_numbers<[1], [0], [0], [1], [0, 0, 1, 1], [], []>} : vector<8x128xbf16>, vector<128x8xbf16>, vector<8x8xf32> -> vector<8x8xf32>
    %c0_17 = arith.constant 0 : index
    %c0_18 = arith.constant 0 : index
    %26 = vector.load %arg7[%c0_17, %c0_18] : memref<1x8xf32, #tpu.memory_space<vmem>>, vector<1x8xf32>
    %27 = vector.broadcast %26 : vector<1x8xf32> to vector<8x8xf32>
    %28 = arith.addf %25, %27 : vector<8x8xf32>
    %c0_19 = arith.constant 0 : index
    %c0_20 = arith.constant 0 : index
    %29 = vector.load %arg8[%c0_19, %c0_20] : memref<8x8xf32, #tpu.memory_space<vmem>>, vector<8x8xf32>
    tpu.vector_store %arg8[%c0_19, %c0_20], %28 {strides = array<i32>} : memref<8x8xf32, #tpu.memory_space<vmem>>, vector<8x8xf32>,
    return
  }
  func.func @transform_0(%arg0: i32) -> (i32, i32) {
    %c0_i32 = arith.constant 0 : i32
    %c0_i32_0 = arith.constant 0 : i32
    return %arg0, %c0_i32 : i32, i32
  }
  func.func @transform_1(%arg0: i32) -> (i32, i32) {
    %c0_i32 = arith.constant 0 : i32
    %c0_i32_0 = arith.constant 0 : i32
    %c0_i32_1 = arith.constant 0 : i32
    return %c0_i32, %c0_i32_0 : i32, i32
  }
  func.func @transform_2(%arg0: i32) -> (i32, i32) {
    %c0_i32 = arith.constant 0 : i32
    %c0_i32_0 = arith.constant 0 : i32
    %c0_i32_1 = arith.constant 0 : i32
    return %c0_i32, %c0_i32_0 : i32, i32
  }
  func.func @transform_3(%arg0: i32) -> (i32, i32) {
    %c0_i32 = arith.constant 0 : i32
    %c0_i32_0 = arith.constant 0 : i32
    %c0_i32_1 = arith.constant 0 : i32
    return %c0_i32, %c0_i32_0 : i32, i32
  }
  func.func @transform_4(%arg0: i32) -> (i32, i32) {
    %c0_i32 = arith.constant 0 : i32
    %c0_i32_0 = arith.constant 0 : i32
    %c0_i32_1 = arith.constant 0 : i32
    return %c0_i32, %c0_i32_0 : i32, i32
  }
  func.func @transform_5(%arg0: i32) -> (i32, i32) {
    %c0_i32 = arith.constant 0 : i32
    %c0_i32_0 = arith.constant 0 : i32
    %c0_i32_1 = arith.constant 0 : i32
    return %c0_i32, %c0_i32_0 : i32, i32
  }
  func.func @transform_6(%arg0: i32) -> (i32, i32) {
    %c0_i32 = arith.constant 0 : i32
    %c0_i32_0 = arith.constant 0 : i32
    %c0_i32_1 = arith.constant 0 : i32
    return %c0_i32, %c0_i32_0 : i32, i32
  }
  func.func @transform_7(%arg0: i32) -> (i32, i32) {
    %c0_i32 = arith.constant 0 : i32
    %c0_i32_0 = arith.constant 0 : i32
    return %arg0, %c0_i32 : i32, i32
  }
}

</mosaic_0001>

<llo_original>
// kernel: tpu_custom_call.1
$region0: #{tpu_custom_call.1}
  #allocation0 [shape = 'u32[]', space=smem, size = 0x4, offset = 0x4, fixed_abs, tag = 'smem constant byte address 0x4 - core index']
  #allocation1 [shape = 'u32[144,128]{1,0:T(1,128)}', space=vmem, size = 0x12000, scoped, tag = 'internal scratch']
  %s0 = inlined_call_operand.vmem [shape: f32[8,64], index: 0, kind: input, shape index: {}]
  %s1 = inlined_call_operand.hbm [shape: bf16[64,512], index: 1, kind: input, shape index: {}]
  %s2 = inlined_call_operand.vmem [shape: f32[1,512], index: 2, kind: input, shape index: {}]
  %s3 = inlined_call_operand.hbm [shape: bf16[512,128], index: 3, kind: input, shape index: {}]
  %s4 = inlined_call_operand.vmem [shape: f32[1,128], index: 4, kind: input, shape index: {}]
  %s5 = inlined_call_operand.vmem [shape: bf16[128,8], index: 5, kind: input, shape index: {}]
  %s6 = inlined_call_operand.vmem [shape: f32[1,8], index: 6, kind: input, shape index: {}]
  %s7 = inlined_call_operand.hbm [shape: f32[8,8], index: 7, kind: output, shape index: {}]
  %s8 = sld [smem:[#allocation0]]
  $region46: #{tpu_custom_call.1} parent=0
    _
  %s10 = ssub.s32 1, %s8
  %s11 = scalar_select 0, %s10, %s8
  $region1: #{tpu_custom_call.1} parent=0
    #allocation2 [shape = 'u8[65536]{0}', space=vmem, size = 0x10000, scoped, tag = 'input window, operand 1, single buffered']
    #allocation3 [shape = 's32[1]{0}', space=sflag, size = 0x4, scoped, tag = 'scoped memory for tpu_custom_call.1']
    #allocation4 [shape = 's32[1]{0}', space=sflag, size = 0x4, scoped, tag = 'scoped memory for tpu_custom_call.1']
    #allocation5 [shape = 'u8[131072]{0}', space=vmem, size = 0x20000, scoped, tag = 'input window, operand 3, single buffered']
    #allocation6 [shape = 's32[1]{0}', space=sflag, size = 0x4, scoped, tag = 'scoped memory for tpu_custom_call.1']
    #allocation7 [shape = 'u8[4096]{0}', space=vmem, size = 0x1000, scoped, tag = 'output window, operand 0, single buffered']
    %12 = vsyncpa [#allocation3], 0
    %13 = vsyncpa [#allocation6], 0
    %14 = vsyncpa [#allocation4], 0
    // Predicated region
    $region2: #{tpu_custom_call.1} parent=1 // pred_check
      _
    $region3: #{tpu_custom_call.1} parent=1 // pred_check_branch
      %16 = sbr.rel (0) target = $region5
    $region4: #{tpu_custom_call.1} parent=1 // pred_region
      _
    $region5: #{tpu_custom_call.1} parent=1 // pred_fallthru
      _
    // Predicated region
    $region6: #{tpu_custom_call.1} parent=1 // pred_check
      _
    $region7: #{tpu_custom_call.1} parent=1 // pred_check_branch
      %18 = sbr.rel (0) target = $region9
    $region8: #{tpu_custom_call.1} parent=1 // pred_region
      %s20 = ssub.s32 2048, 2048
      %21 = vsyncadd [#allocation3], %s20
      %s22 = sshll.u32 [#allocation2], 4
      %s23 = int_to_ptr.vmem [resolvable:$true] %s22
      %28 = dma.hbm_to_vmem [thread:$0]  %s1, 2048, %s23, [#allocation3], 256, 256, 16
    $region9: #{tpu_custom_call.1} parent=1 // pred_fallthru
      _
    // Predicated region
    $region10: #{tpu_custom_call.1} parent=1 // pred_check
      _
    $region11: #{tpu_custom_call.1} parent=1 // pred_check_branch
      %30 = sbr.rel (0) target = $region13
    $region12: #{tpu_custom_call.1} parent=1 // pred_region
      _
    $region13: #{tpu_custom_call.1} parent=1 // pred_fallthru
      _
    // Predicated region
    $region14: #{tpu_custom_call.1} parent=1 // pred_check
      _
    $region15: #{tpu_custom_call.1} parent=1 // pred_check_branch
      %32 = sbr.rel (0) target = $region17
    $region16: #{tpu_custom_call.1} parent=1 // pred_region
      %s34 = ssub.s32 4096, 4096
      %35 = vsyncadd [#allocation6], %s34
      %s36 = sshll.u32 [#allocation5], 4
      %s37 = int_to_ptr.vmem [resolvable:$true] %s36
      %42 = dma.hbm_to_vmem [thread:$0]  %s3, 4096, %s37, [#allocation6], 64, 64, 4
    $region17: #{tpu_custom_call.1} parent=1 // pred_fallthru
      _
    // Predicated region
    $region18: #{tpu_custom_call.1} parent=1 // pred_check
      _
    $region19: #{tpu_custom_call.1} parent=1 // pred_check_branch
      %44 = sbr.rel (0) target = $region21
    $region20: #{tpu_custom_call.1} parent=1 // pred_region
      _
    $region21: #{tpu_custom_call.1} parent=1 // pred_fallthru
      _
    // Predicated region
    $region22: #{tpu_custom_call.1} parent=1 // pred_check
      _
    $region23: #{tpu_custom_call.1} parent=1 // pred_check_branch
      %46 = sbr.rel (0) target = $region25
    $region24: #{tpu_custom_call.1} parent=1 // pred_region
      _
    $region25: #{tpu_custom_call.1} parent=1 // pred_fallthru
      _
    // Predicated region
    $region26: #{tpu_custom_call.1} parent=1 // pred_check
      _
    $region27: #{tpu_custom_call.1} parent=1 // pred_check_branch
      %48 = sbr.rel (0) target = $region29
    $region28: #{tpu_custom_call.1} parent=1 // pred_region
      _
    $region29: #{tpu_custom_call.1} parent=1 // pred_fallthru
      _
    // Predicated region
    $region30: #{tpu_custom_call.1} parent=1 // pred_check
      _
    $region31: #{tpu_custom_call.1} parent=1 // pred_check_branch
      %50 = sbr.rel (0) target = $region33
    $region32: #{tpu_custom_call.1} parent=1 // pred_region
      %51 = dma.done [#allocation3], 2048
    $region33: #{tpu_custom_call.1} parent=1 // pred_fallthru
      _
    // Predicated region
    $region34: #{tpu_custom_call.1} parent=1 // pred_check
      _
    $region35: #{tpu_custom_call.1} parent=1 // pred_check_branch
      %53 = sbr.rel (0) target = $region37
    $region36: #{tpu_custom_call.1} parent=1 // pred_region
      %54 = dma.done [#allocation6], 4096
    $region37: #{tpu_custom_call.1} parent=1 // pred_fallthru
      _
    %v56 = vld [vmem:[%s0] sm:$0xff]
    %v57 = vpack.c.bf16 %v56, %v56
    %v58 = vld [vmem:[#allocation2] sm:$0xff]
    %v59 = vld [vmem:[#allocation2 + $0x8] sm:$0xff]
    %v60 = vld [vmem:[#allocation2 + $0x10] sm:$0xff]
    %v61 = vld [vmem:[#allocation2 + $0x18] sm:$0xff]
    %v62 = vld [vmem:[#allocation2 + $0x20] sm:$0xff]
    %v63 = vld [vmem:[#allocation2 + $0x28] sm:$0xff]
    %v64 = vld [vmem:[#allocation2 + $0x30] sm:$0xff]
    %v65 = vld [vmem:[#allocation2 + $0x38] sm:$0xff]
    %v66 = vld [vmem:[#allocation2 + $0x40] sm:$0xff]
    %v67 = vld [vmem:[#allocation2 + $0x48] sm:$0xff]
    %v68 = vld [vmem:[#allocation2 + $0x50] sm:$0xff]
    %v69 = vld [vmem:[#allocation2 + $0x58] sm:$0xff]
    %v70 = vld [vmem:[#allocation2 + $0x60] sm:$0xff]
    %v71 = vld [vmem:[#allocation2 + $0x68] sm:$0xff]
    %v72 = vld [vmem:[#allocation2 + $0x70] sm:$0xff]
    %v73 = vld [vmem:[#allocation2 + $0x78] sm:$0xff]
    %v74 = vld [vmem:[%s2] sm:$0xf]
    %v76 = vlaneseq
    %v77 = vshrl.u32 %v76, 7
    %v78 = vsub.s32 0, %v77
    %v79 = vrot.slane %v74, %v78
    %v80 = vlaneseq
    %v81 = vshrl.u32 %v80, 7
    %v82 = vsub.s32 1, %v81
    %v83 = vrot.slane %v74, %v82
    %v84 = vlaneseq
    %v85 = vshrl.u32 %v84, 7
    %v86 = vsub.s32 2, %v85
    %v87 = vrot.slane %v74, %v86
    %v88 = vlaneseq
    %v89 = vshrl.u32 %v88, 7
    %v90 = vsub.s32 3, %v89
    %v91 = vrot.slane %v74, %v90
    %v112 = vunpack.c.l.b16 %v58
    %v113 = vunpack.c.h.b16 %v58
    %v114 = vunpack.c.l.b16 %v59
    %v115 = vunpack.c.h.b16 %v59
    %v116 = vunpack.c.l.b16 %v60
    %v117 = vunpack.c.h.b16 %v60
    %v118 = vunpack.c.l.b16 %v61
    %v119 = vunpack.c.h.b16 %v61
    %v120 = vunpack.c.l.b16 %v62
    %v121 = vunpack.c.h.b16 %v62
    %v122 = vunpack.c.l.b16 %v63
    %v123 = vunpack.c.h.b16 %v63
    %v124 = vunpack.c.l.b16 %v64
    %v125 = vunpack.c.h.b16 %v64
    %v126 = vunpack.c.l.b16 %v65
    %v127 = vunpack.c.h.b16 %v65
    %v128 = vunpack.c.l.b16 %v66
    %v129 = vunpack.c.h.b16 %v66
    %v130 = vunpack.c.l.b16 %v67
    %v131 = vunpack.c.h.b16 %v67
    %v132 = vunpack.c.l.b16 %v68
    %v133 = vunpack.c.h.b16 %v68
    %v134 = vunpack.c.l.b16 %v69
    %v135 = vunpack.c.h.b16 %v69
    %v136 = vunpack.c.l.b16 %v70
    %v137 = vunpack.c.h.b16 %v70
    %v138 = vunpack.c.l.b16 %v71
    %v139 = vunpack.c.h.b16 %v71
    %v140 = vunpack.c.l.b16 %v72
    %v141 = vunpack.c.h.b16 %v72
    %v142 = vunpack.c.l.b16 %v73
    %v143 = vunpack.c.h.b16 %v73
    %v144 = vpack.c.b16 %v116, %v112
    %v145 = vpack.c.b16 %v117, %v113
    %v146 = vpack.c.b16 %v118, %v114
    %v147 = vpack.c.b16 %v119, %v115
    %v148 = vpack.c.b16 %v124, %v120
    %v149 = vpack.c.b16 %v125, %v121
    %v150 = vpack.c.b16 %v126, %v122
    %v151 = vpack.c.b16 %v127, %v123
    %v152 = vpack.c.b16 %v132, %v128
    %v153 = vpack.c.b16 %v133, %v129
    %v154 = vpack.c.b16 %v134, %v130
    %v155 = vpack.c.b16 %v135, %v131
    %v156 = vpack.c.b16 %v140, %v136
    %v157 = vpack.c.b16 %v141, %v137
    %v158 = vpack.c.b16 %v142, %v138
    %v159 = vpack.c.b16 %v143, %v139
    %vm176 = vcmask 523264
    %v178 = vsel %vm176, %v57, 0
    %180 = vmatprep.subr.bf16.mxu0 %v145
    %181 = vmatpush1.bf16.msra.mxu0 %v144
    %182 = vmatprep.subr.bf16.mxu0 %v149
    %183 = vmatpush1.bf16.msra.mxu0 %v148
    %184 = vmatprep.subr.bf16.mxu0 %v153
    %185 = vmatpush1.bf16.msra.mxu0 %v152
    %186 = vmatprep.subr.bf16.mxu0 %v157
    %187 = vmatpush1.bf16.msra.mxu0 %v156
    %188 = vmatprep.subr.bf16.mxu0 0
    %189 = vmatpush1.bf16.msra.mxu0 0
    %190 = vmatprep.subr.bf16.mxu0 0
    %191 = vmatpush1.bf16.msra.mxu0 0
    %192 = vmatprep.subr.bf16.mxu0 0
    %193 = vmatpush1.bf16.msra.mxu0 0
    %194 = vmatprep.subr.bf16.mxu0 0
    %195 = vmatpush1.bf16.msra.mxu0 0
    %196 = vmatprep.subr.bf16.mxu0 0
    %197 = vmatpush1.bf16.msra.mxu0 0
    %198 = vmatprep.subr.bf16.mxu0 0
    %199 = vmatpush1.bf16.msra.mxu0 0
    %200 = vmatprep.subr.bf16.mxu0 0
    %201 = vmatpush1.bf16.msra.mxu0 0
    %202 = vmatprep.subr.bf16.mxu0 0
    %203 = vmatpush1.bf16.msra.mxu0 0
    %204 = vmatprep.subr.bf16.mxu0 0
    %205 = vmatpush1.bf16.msra.mxu0 0
    %206 = vmatprep.subr.bf16.mxu0 0
    %207 = vmatpush1.bf16.msra.mxu0 0
    %208 = vmatprep.subr.bf16.mxu0 0
    %209 = vmatpush1.bf16.msra.mxu0 0
    %210 = vmatprep.subr.bf16.mxu0 0
    %211 = vmatpush1.bf16.msra.mxu0 0
    %212 = vmatprep.mubr.bf16.mxu0 0
    %213 = vmatmul.mubr.bf16.gmra.mrb[0].mxu0 %v178
    %v214 = vpop.f32.mrb[0].mxu0
    %v215 = vadd.f32 %v79, %v214
    %v216 = vpop.f32.mrb[0].mxu0
    %v217 = vadd.f32 %v83, %v216
    %v218 = vpop.f32.mrb[0].mxu0
    %v219 = vpop.f32.mrb[0].mxu0
    %220 = vdwg.mxu0
    %221 = vmatprep.subr.bf16.mxu0 %v147
    %222 = vmatpush1.bf16.msra.mxu0 %v146
    %223 = vmatprep.subr.bf16.mxu0 %v151
    %224 = vmatpush1.bf16.msra.mxu0 %v150
    %225 = vmatprep.subr.bf16.mxu0 %v155
    %226 = vmatpush1.bf16.msra.mxu0 %v154
    %227 = vmatprep.subr.bf16.mxu0 %v159
    %228 = vmatpush1.bf16.msra.mxu0 %v158
    %229 = vmatprep.subr.bf16.mxu0 0
    %230 = vmatpush1.bf16.msra.mxu0 0
    %231 = vmatprep.subr.bf16.mxu0 0
    %232 = vmatpush1.bf16.msra.mxu0 0
    %233 = vmatprep.subr.bf16.mxu0 0
    %234 = vmatpush1.bf16.msra.mxu0 0
    %235 = vmatprep.subr.bf16.mxu0 0
    %236 = vmatpush1.bf16.msra.mxu0 0
    %237 = vmatprep.subr.bf16.mxu0 0
    %238 = vmatpush1.bf16.msra.mxu0 0
    %239 = vmatprep.subr.bf16.mxu0 0
    %240 = vmatpush1.bf16.msra.mxu0 0
    %241 = vmatprep.subr.bf16.mxu0 0
    %242 = vmatpush1.bf16.msra.mxu0 0
    %243 = vmatprep.subr.bf16.mxu0 0
    %244 = vmatpush1.bf16.msra.mxu0 0
    %245 = vmatprep.subr.bf16.mxu0 0
    %246 = vmatpush1.bf16.msra.mxu0 0
    %247 = vmatprep.subr.bf16.mxu0 0
    %248 = vmatpush1.bf16.msra.mxu0 0
    %249 = vmatprep.subr.bf16.mxu0 0
    %250 = vmatpush1.bf16.msra.mxu0 0
    %251 = vmatprep.subr.bf16.mxu0 0
    %252 = vmatpush1.bf16.msra.mxu0 0
    %253 = vmatprep.mubr.bf16.mxu0 0
    %254 = vmatmul.mubr.bf16.gmra.mrb[0].mxu0 %v178
    %v255 = vpop.f32.mrb[0].mxu0
    %v256 = vadd.f32 %v87, %v255
    %v257 = vpop.f32.mrb[0].mxu0
    %v258 = vadd.f32 %v91, %v257
    %v259 = vpop.f32.mrb[0].mxu0
    %v260 = vpop.f32.mrb[0].mxu0
    %261 = vdwg.mxu0
    %vm262 = vcmp.gt.f32.partialorder %v215, 0.0
    %vm263 = vcmp.gt.f32.partialorder %v217, 0.0
    %vm264 = vcmp.gt.f32.partialorder %v256, 0.0
    %vm265 = vcmp.gt.f32.partialorder %v258, 0.0
    %v266 = vmul.f32 %v215, 0.01
    %v267 = vmul.f32 %v217, 0.01
    %v268 = vmul.f32 %v256, 0.01
    %v269 = vmul.f32 %v258, 0.01
    %v270 = vsel %vm262, %v215, %v266
    %v271 = vsel %vm263, %v217, %v267
    %v272 = vsel %vm264, %v256, %v268
    %v273 = vsel %vm265, %v258, %v269
    %v274 = vpack.c.bf16 %v270, %v270
    %v275 = vpack.c.bf16 %v271, %v271
    %v276 = vpack.c.bf16 %v272, %v272
    %v277 = vpack.c.bf16 %v273, %v273
    %v278 = vld [vmem:[#allocation5] sm:$0xf]
    %v279 = vld [vmem:[#allocation5 + $0x4] sm:$0xf]
    %v280 = vld [vmem:[#allocation5 + $0x8] sm:$0xf]
    %v281 = vld [vmem:[#allocation5 + $0xc] sm:$0xf]
    %v282 = vld [vmem:[#allocation5 + $0x10] sm:$0xf]
    %v283 = vld [vmem:[#allocation5 + $0x14] sm:$0xf]
    %v284 = vld [vmem:[#allocation5 + $0x18] sm:$0xf]
    %v285 = vld [vmem:[#allocation5 + $0x1c] sm:$0xf]
    %v286 = vld [vmem:[#allocation5 + $0x20] sm:$0xf]
    %v287 = vld [vmem:[#allocation5 + $0x24] sm:$0xf]
    %v288 = vld [vmem:[#allocation5 + $0x28] sm:$0xf]
    %v289 = vld [vmem:[#allocation5 + $0x2c] sm:$0xf]
    %v290 = vld [vmem:[#allocation5 + $0x30] sm:$0xf]
    %v291 = vld [vmem:[#allocation5 + $0x34] sm:$0xf]
    %v292 = vld [vmem:[#allocation5 + $0x38] sm:$0xf]
    %v293 = vld [vmem:[#allocation5 + $0x3c] sm:$0xf]
    %v294 = vld [vmem:[#allocation5 + $0x40] sm:$0xf]
    %v295 = vld [vmem:[#allocation5 + $0x44] sm:$0xf]
    %v296 = vld [vmem:[#allocation5 + $0x48] sm:$0xf]
    %v297 = vld [vmem:[#allocation5 + $0x4c] sm:$0xf]
    %v298 = vld [vmem:[#allocation5 + $0x50] sm:$0xf]
    %v299 = vld [vmem:[#allocation5 + $0x54] sm:$0xf]
    %v300 = vld [vmem:[#allocation5 + $0x58] sm:$0xf]
    %v301 = vld [vmem:[#allocation5 + $0x5c] sm:$0xf]
    %v302 = vld [vmem:[#allocation5 + $0x60] sm:$0xf]
    %v303 = vld [vmem:[#allocation5 + $0x64] sm:$0xf]
    %v304 = vld [vmem:[#allocation5 + $0x68] sm:$0xf]
    %v305 = vld [vmem:[#allocation5 + $0x6c] sm:$0xf]
    %v306 = vld [vmem:[#allocation5 + $0x70] sm:$0xf]
    %v307 = vld [vmem:[#allocation5 + $0x74] sm:$0xf]
    %v308 = vld [vmem:[#allocation5 + $0x78] sm:$0xf]
    %v309 = vld [vmem:[#allocation5 + $0x7c] sm:$0xf]
    %v310 = vld [vmem:[#allocation5 + $0x80] sm:$0xf]
    %v311 = vld [vmem:[#allocation5 + $0x84] sm:$0xf]
    %v312 = vld [vmem:[#allocation5 + $0x88] sm:$0xf]
    %v313 = vld [vmem:[#allocation5 + $0x8c] sm:$0xf]
    %v314 = vld [vmem:[#allocation5 + $0x90] sm:$0xf]
    %v315 = vld [vmem:[#allocation5 + $0x94] sm:$0xf]
    %v316 = vld [vmem:[#allocation5 + $0x98] sm:$0xf]
    %v317 = vld [vmem:[#allocation5 + $0x9c] sm:$0xf]
    %v318 = vld [vmem:[#allocation5 + $0xa0] sm:$0xf]
    %v319 = vld [vmem:[#allocation5 + $0xa4] sm:$0xf]
    %v320 = vld [vmem:[#allocation5 + $0xa8] sm:$0xf]
    %v321 = vld [vmem:[#allocation5 + $0xac] sm:$0xf]
    %v322 = vld [vmem:[#allocation5 + $0xb0] sm:$0xf]
    %v323 = vld [vmem:[#allocation5 + $0xb4] sm:$0xf]
    %v324 = vld [vmem:[#allocation5 + $0xb8] sm:$0xf]
    %v325 = vld [vmem:[#allocation5 + $0xbc] sm:$0xf]
    %v326 = vld [vmem:[#allocation5 + $0xc0] sm:$0xf]
    %v327 = vld [vmem:[#allocation5 + $0xc4] sm:$0xf]
    %v328 = vld [vmem:[#allocation5 + $0xc8] sm:$0xf]
    %v329 = vld [vmem:[#allocation5 + $0xcc] sm:$0xf]
    %v330 = vld [vmem:[#allocation5 + $0xd0] sm:$0xf]
    %v331 = vld [vmem:[#allocation5 + $0xd4] sm:$0xf]
    %v332 = vld [vmem:[#allocation5 + $0xd8] sm:$0xf]
    %v333 = vld [vmem:[#allocation5 + $0xdc] sm:$0xf]
    %v334 = vld [vmem:[#allocation5 + $0xe0] sm:$0xf]
    %v335 = vld [vmem:[#allocation5 + $0xe4] sm:$0xf]
    %v336 = vld [vmem:[#allocation5 + $0xe8] sm:$0xf]
    %v337 = vld [vmem:[#allocation5 + $0xec] sm:$0xf]
    %v338 = vld [vmem:[#allocation5 + $0xf0] sm:$0xf]
    %v339 = vld [vmem:[#allocation5 + $0xf4] sm:$0xf]
    %v340 = vld [vmem:[#allocation5 + $0xf8] sm:$0xf]
    %v341 = vld [vmem:[#allocation5 + $0xfc] sm:$0xf]
    %v342 = vld [vmem:[%s4] sm:$0x1]
    %v344 = vlaneseq
    %v345 = vshrl.u32 %v344, 7
    %v346 = vsub.s32 0, %v345
    %v347 = vrot.slane %v342, %v346
    %v413 = vunpack.c.l.b16 %v278
    %v414 = vunpack.c.l.b16 %v279
    %v415 = vunpack.c.l.b16 %v280
    %v416 = vunpack.c.l.b16 %v281
    %v417 = vunpack.c.l.b16 %v282
    %v418 = vunpack.c.l.b16 %v283
    %v419 = vunpack.c.l.b16 %v284
    %v420 = vunpack.c.l.b16 %v285
    %v421 = vunpack.c.l.b16 %v286
    %v422 = vunpack.c.l.b16 %v287
    %v423 = vunpack.c.l.b16 %v288
    %v424 = vunpack.c.l.b16 %v289
    %v425 = vunpack.c.l.b16 %v290
    %v426 = vunpack.c.l.b16 %v291
    %v427 = vunpack.c.l.b16 %v292
    %v428 = vunpack.c.l.b16 %v293
    %v429 = vunpack.c.l.b16 %v294
    %v430 = vunpack.c.l.b16 %v295
    %v431 = vunpack.c.l.b16 %v296
    %v432 = vunpack.c.l.b16 %v297
    %v433 = vunpack.c.l.b16 %v298
    %v434 = vunpack.c.l.b16 %v299
    %v435 = vunpack.c.l.b16 %v300
    %v436 = vunpack.c.l.b16 %v301
    %v437 = vunpack.c.l.b16 %v302
    %v438 = vunpack.c.l.b16 %v303
    %v439 = vunpack.c.l.b16 %v304
    %v440 = vunpack.c.l.b16 %v305
    %v441 = vunpack.c.l.b16 %v306
    %v442 = vunpack.c.l.b16 %v307
    %v443 = vunpack.c.l.b16 %v308
    %v444 = vunpack.c.l.b16 %v309
    %v445 = vunpack.c.l.b16 %v310
    %v446 = vunpack.c.l.b16 %v311
    %v447 = vunpack.c.l.b16 %v312
    %v448 = vunpack.c.l.b16 %v313
    %v449 = vunpack.c.l.b16 %v314
    %v450 = vunpack.c.l.b16 %v315
    %v451 = vunpack.c.l.b16 %v316
    %v452 = vunpack.c.l.b16 %v317
    %v453 = vunpack.c.l.b16 %v318
    %v454 = vunpack.c.l.b16 %v319
    %v455 = vunpack.c.l.b16 %v320
    %v456 = vunpack.c.l.b16 %v321
    %v457 = vunpack.c.l.b16 %v322
    %v458 = vunpack.c.l.b16 %v323
    %v459 = vunpack.c.l.b16 %v324
    %v460 = vunpack.c.l.b16 %v325
    %v461 = vunpack.c.l.b16 %v326
    %v462 = vunpack.c.l.b16 %v327
    %v463 = vunpack.c.l.b16 %v328
    %v464 = vunpack.c.l.b16 %v329
    %v465 = vunpack.c.l.b16 %v330
    %v466 = vunpack.c.l.b16 %v331
    %v467 = vunpack.c.l.b16 %v332
    %v468 = vunpack.c.l.b16 %v333
    %v469 = vunpack.c.l.b16 %v334
    %v470 = vunpack.c.l.b16 %v335
    %v471 = vunpack.c.l.b16 %v336
    %v472 = vunpack.c.l.b16 %v337
    %v473 = vunpack.c.l.b16 %v338
    %v474 = vunpack.c.l.b16 %v339
    %v475 = vunpack.c.l.b16 %v340
    %v476 = vunpack.c.l.b16 %v341
    %v477 = vpack.c.b16 %v414, %v413
    %v478 = vpack.c.b16 %v416, %v415
    %v479 = vpack.c.b16 %v418, %v417
    %v480 = vpack.c.b16 %v420, %v419
    %v481 = vpack.c.b16 %v422, %v421
    %v482 = vpack.c.b16 %v424, %v423
    %v483 = vpack.c.b16 %v426, %v425
    %v484 = vpack.c.b16 %v428, %v427
    %v485 = vpack.c.b16 %v430, %v429
    %v486 = vpack.c.b16 %v432, %v431
    %v487 = vpack.c.b16 %v434, %v433
    %v488 = vpack.c.b16 %v436, %v435
    %v489 = vpack.c.b16 %v438, %v437
    %v490 = vpack.c.b16 %v440, %v439
    %v491 = vpack.c.b16 %v442, %v441
    %v492 = vpack.c.b16 %v444, %v443
    %v493 = vpack.c.b16 %v446, %v445
    %v494 = vpack.c.b16 %v448, %v447
    %v495 = vpack.c.b16 %v450, %v449
    %v496 = vpack.c.b16 %v452, %v451
    %v497 = vpack.c.b16 %v454, %v453
    %v498 = vpack.c.b16 %v456, %v455
    %v499 = vpack.c.b16 %v458, %v457
    %v500 = vpack.c.b16 %v460, %v459
    %v501 = vpack.c.b16 %v462, %v461
    %v502 = vpack.c.b16 %v464, %v463
    %v503 = vpack.c.b16 %v466, %v465
    %v504 = vpack.c.b16 %v468, %v467
    %v505 = vpack.c.b16 %v470, %v469
    %v506 = vpack.c.b16 %v472, %v471
    %v507 = vpack.c.b16 %v474, %v473
    %v508 = vpack.c.b16 %v476, %v475
    %541 = vmatprep.subr.bf16.mxu0 0
    %542 = vmatpush1.bf16.msra.mxu0 %v477
    %543 = vmatprep.subr.bf16.mxu0 0
    %544 = vmatpush1.bf16.msra.mxu0 %v478
    %545 = vmatprep.subr.bf16.mxu0 0
    %546 = vmatpush1.bf16.msra.mxu0 %v479
    %547 = vmatprep.subr.bf16.mxu0 0
    %548 = vmatpush1.bf16.msra.mxu0 %v480
    %549 = vmatprep.subr.bf16.mxu0 0
    %550 = vmatpush1.bf16.msra.mxu0 %v481
    %551 = vmatprep.subr.bf16.mxu0 0
    %552 = vmatpush1.bf16.msra.mxu0 %v482
    %553 = vmatprep.subr.bf16.mxu0 0
    %554 = vmatpush1.bf16.msra.mxu0 %v483
    %555 = vmatprep.subr.bf16.mxu0 0
    %556 = vmatpush1.bf16.msra.mxu0 %v484
    %557 = vmatprep.subr.bf16.mxu0 0
    %558 = vmatpush1.bf16.msra.mxu0 %v485
    %559 = vmatprep.subr.bf16.mxu0 0
    %560 = vmatpush1.bf16.msra.mxu0 %v486
    %561 = vmatprep.subr.bf16.mxu0 0
    %562 = vmatpush1.bf16.msra.mxu0 %v487
    %563 = vmatprep.subr.bf16.mxu0 0
    %564 = vmatpush1.bf16.msra.mxu0 %v488
    %565 = vmatprep.subr.bf16.mxu0 0
    %566 = vmatpush1.bf16.msra.mxu0 %v489
    %567 = vmatprep.subr.bf16.mxu0 0
    %568 = vmatpush1.bf16.msra.mxu0 %v490
    %569 = vmatprep.subr.bf16.mxu0 0
    %570 = vmatpush1.bf16.msra.mxu0 %v491
    %571 = vmatprep.subr.bf16.mxu0 0
    %572 = vmatpush1.bf16.msra.mxu0 %v492
    %573 = vmatprep.mubr.bf16.mxu0 %v275
    %574 = vmatmul.mubr.bf16.gmra.mrb[0].mxu0 %v274
    %v575 = vpop.f32.mrb[0].mxu0
    %v576 = vadd.f32 %v347, %v575
    %v577 = vpop.f32.mrb[0].mxu0
    %v578 = vpop.f32.mrb[0].mxu0
    %v579 = vpop.f32.mrb[0].mxu0
    %580 = vdwg.mxu0
    %581 = vmatprep.subr.bf16.mxu0 0
    %582 = vmatpush1.bf16.msra.mxu0 %v493
    %583 = vmatprep.subr.bf16.mxu0 0
    %584 = vmatpush1.bf16.msra.mxu0 %v494
    %585 = vmatprep.subr.bf16.mxu0 0
    %586 = vmatpush1.bf16.msra.mxu0 %v495
    %587 = vmatprep.subr.bf16.mxu0 0
    %588 = vmatpush1.bf16.msra.mxu0 %v496
    %589 = vmatprep.subr.bf16.mxu0 0
    %590 = vmatpush1.bf16.msra.mxu0 %v497
    %591 = vmatprep.subr.bf16.mxu0 0
    %592 = vmatpush1.bf16.msra.mxu0 %v498
    %593 = vmatprep.subr.bf16.mxu0 0
    %594 = vmatpush1.bf16.msra.mxu0 %v499
    %595 = vmatprep.subr.bf16.mxu0 0
    %596 = vmatpush1.bf16.msra.mxu0 %v500
    %597 = vmatprep.subr.bf16.mxu0 0
    %598 = vmatpush1.bf16.msra.mxu0 %v501
    %599 = vmatprep.subr.bf16.mxu0 0
    %600 = vmatpush1.bf16.msra.mxu0 %v502
    %601 = vmatprep.subr.bf16.mxu0 0
    %602 = vmatpush1.bf16.msra.mxu0 %v503
    %603 = vmatprep.subr.bf16.mxu0 0
    %604 = vmatpush1.bf16.msra.mxu0 %v504
    %605 = vmatprep.subr.bf16.mxu0 0
    %606 = vmatpush1.bf16.msra.mxu0 %v505
    %607 = vmatprep.subr.bf16.mxu0 0
    %608 = vmatpush1.bf16.msra.mxu0 %v506
    %609 = vmatprep.subr.bf16.mxu0 0
    %610 = vmatpush1.bf16.msra.mxu0 %v507
    %611 = vmatprep.subr.bf16.mxu0 0
    %612 = vmatpush1.bf16.msra.mxu0 %v508
    %613 = vmatprep.mubr.bf16.mxu0 %v277
    %614 = vmatmul.mubr.bf16.gmra.mrb[0].mxu0 %v276
    %v615 = vpop.f32.mrb[0].mxu0
    %v616 = vadd.f32 %v576, %v615
    %v617 = vpop.f32.mrb[0].mxu0
    %v618 = vpop.f32.mrb[0].mxu0
    %v619 = vpop.f32.mrb[0].mxu0
    %620 = vdwg.mxu0
    %vm621 = vcmp.gt.f32.partialorder %v616, 0.0
    %v622 = vmul.f32 %v616, 0.01
    %v623 = vsel %vm621, %v616, %v622
    %v624 = vpack.c.bf16 %v623, %v623
    %v625 = vld [vmem:[%s5] sm:$0xf]
    %v626 = vld [vmem:[%s5 + $0x4] sm:$0xf]
    %v627 = vld [vmem:[%s5 + $0x8] sm:$0xf]
    %v628 = vld [vmem:[%s5 + $0xc] sm:$0xf]
    %v629 = vld [vmem:[%s5 + $0x10] sm:$0xf]
    %v630 = vld [vmem:[%s5 + $0x14] sm:$0xf]
    %v631 = vld [vmem:[%s5 + $0x18] sm:$0xf]
    %v632 = vld [vmem:[%s5 + $0x1c] sm:$0xf]
    %v633 = vld [vmem:[%s5 + $0x20] sm:$0xf]
    %v634 = vld [vmem:[%s5 + $0x24] sm:$0xf]
    %v635 = vld [vmem:[%s5 + $0x28] sm:$0xf]
    %v636 = vld [vmem:[%s5 + $0x2c] sm:$0xf]
    %v637 = vld [vmem:[%s5 + $0x30] sm:$0xf]
    %v638 = vld [vmem:[%s5 + $0x34] sm:$0xf]
    %v639 = vld [vmem:[%s5 + $0x38] sm:$0xf]
    %v640 = vld [vmem:[%s5 + $0x3c] sm:$0xf]
    %v641 = vld [vmem:[%s6] sm:$0x1]
    %v643 = vlaneseq
    %v644 = vshrl.u32 %v643, 7
    %v645 = vsub.s32 0, %v644
    %v646 = vrot.slane %v641, %v645
    %v664 = vunpack.c.l.b16 %v625
    %v665 = vunpack.c.l.b16 %v626
    %v666 = vunpack.c.l.b16 %v627
    %v667 = vunpack.c.l.b16 %v628
    %v668 = vunpack.c.l.b16 %v629
    %v669 = vunpack.c.l.b16 %v630
    %v670 = vunpack.c.l.b16 %v631
    %v671 = vunpack.c.l.b16 %v632
    %v672 = vunpack.c.l.b16 %v633
    %v673 = vunpack.c.l.b16 %v634
    %v674 = vunpack.c.l.b16 %v635
    %v675 = vunpack.c.l.b16 %v636
    %v676 = vunpack.c.l.b16 %v637
    %v677 = vunpack.c.l.b16 %v638
    %v678 = vunpack.c.l.b16 %v639
    %v679 = vunpack.c.l.b16 %v640
    %v680 = vpack.c.b16 %v665, %v664
    %v681 = vpack.c.b16 %v667, %v666
    %v682 = vpack.c.b16 %v669, %v668
    %v683 = vpack.c.b16 %v671, %v670
    %v684 = vpack.c.b16 %v673, %v672
    %v685 = vpack.c.b16 %v675, %v674
    %v686 = vpack.c.b16 %v677, %v676
    %v687 = vpack.c.b16 %v679, %v678
    %696 = vmatprep.subr.bf16.mxu0 0
    %697 = vmatpush1.bf16.msra.mxu0 %v680
    %698 = vmatprep.subr.bf16.mxu0 0
    %699 = vmatpush1.bf16.msra.mxu0 %v681
    %700 = vmatprep.subr.bf16.mxu0 0
    %701 = vmatpush1.bf16.msra.mxu0 %v682
    %702 = vmatprep.subr.bf16.mxu0 0
    %703 = vmatpush1.bf16.msra.mxu0 %v683
    %704 = vmatprep.subr.bf16.mxu0 0
    %705 = vmatpush1.bf16.msra.mxu0 %v684
    %706 = vmatprep.subr.bf16.mxu0 0
    %707 = vmatpush1.bf16.msra.mxu0 %v685
    %708 = vmatprep.subr.bf16.mxu0 0
    %709 = vmatpush1.bf16.msra.mxu0 %v686
    %710 = vmatprep.subr.bf16.mxu0 0
    %711 = vmatpush1.bf16.msra.mxu0 %v687
    %712 = vmatprep.subr.bf16.mxu0 0
    %713 = vmatpush1.bf16.msra.mxu0 0
    %714 = vmatprep.subr.bf16.mxu0 0
    %715 = vmatpush1.bf16.msra.mxu0 0
    %716 = vmatprep.subr.bf16.mxu0 0
    %717 = vmatpush1.bf16.msra.mxu0 0
    %718 = vmatprep.subr.bf16.mxu0 0
    %719 = vmatpush1.bf16.msra.mxu0 0
    %720 = vmatprep.subr.bf16.mxu0 0
    %721 = vmatpush1.bf16.msra.mxu0 0
    %722 = vmatprep.subr.bf16.mxu0 0
    %723 = vmatpush1.bf16.msra.mxu0 0
    %724 = vmatprep.subr.bf16.mxu0 0
    %725 = vmatpush1.bf16.msra.mxu0 0
    %726 = vmatprep.subr.bf16.mxu0 0
    %727 = vmatpush1.bf16.msra.mxu0 0
    %728 = vmatprep.mubr.bf16.mxu0 0
    %729 = vmatmul.mubr.bf16.gmra.mrb[0].mxu0 %v624
    %v730 = vpop.f32.mrb[0].mxu0
    %v731 = vadd.f32 %v646, %v730
    %v732 = vpop.f32.mrb[0].mxu0
    %v733 = vpop.f32.mrb[0].mxu0
    %v734 = vpop.f32.mrb[0].mxu0
    %735 = vdwg.mxu0
    %vm736 = vcmask 64512
    %737 = vst.msk [vmem:[#allocation7] sm:$0xff] %vm736, %v731
    // Predicated region
    $region38: #{tpu_custom_call.1} parent=1 // pred_check
      _
    $region39: #{tpu_custom_call.1} parent=1 // pred_check_branch
      %739 = sbr.rel (0) target = $region41
    $region40: #{tpu_custom_call.1} parent=1 // pred_region
      %s741 = ssub.s32 128, 128
      %742 = vsyncadd [#allocation4], %s741
      %s744 = sshll.u32 [#allocation7], 4
      %s745 = int_to_ptr.vmem [resolvable:$true] %s744
      %747 = dma.vmem_to_hbm [thread:$0]  %s745, 128, %s7, [#allocation4]
    $region41: #{tpu_custom_call.1} parent=1 // pred_fallthru
      _
    // Predicated region
    $region42: #{tpu_custom_call.1} parent=1 // pred_check
      _
    $region43: #{tpu_custom_call.1} parent=1 // pred_check_branch
      %749 = sbr.rel (0) target = $region45
    $region44: #{tpu_custom_call.1} parent=1 // pred_region
      %750 = dma.done [#allocation4], 128
    $region45: #{tpu_custom_call.1} parent=1 // pred_fallthru
      _
    %751 = vsyncpa [#allocation3], 1
    %752 = vsyncpa [#allocation6], 1
    %753 = vsyncpa [#allocation4], 1

</llo_original>
